<compile_context>
chip_gen: v7x
topology: tpu7x:2x2x1
jax: 0.10.0
libtpu: 0.0.40
codegen_flags: <defaults>
</compile_context>

<pallas_src>
import jax
import jax.numpy as jnp
from jax import lax
from jax.experimental import pallas as pl
from jax.experimental.pallas import tpu as pltpu

DOWN = 8                      # SMFA.down_scale
LANES = 128                   # TPU lane width
_K0 = 0.7978845608028654      # sqrt(2/pi)
_K1 = 0.044715


def _gelu(z):
    # tanh-approximate GELU (EUP slot); |err| < 3e-3 vs exact erf GELU.
    return 0.5 * z * (1.0 + jnp.tanh(_K0 * (z + _K1 * z * z * z)))


def _round_up(n, m):
    return (n + m - 1) // m * m


# ----------------------------- depthwise convs --------------------------------
def _dwconv3x3_zero_pad(x, w, b):
    """Depthwise 3x3, zero pad on H and W.  x:(H,W,C) w:(3,3,C) b:(1,C).
    Only used on the tiny (H/8, W/8) pooled map (pass 2)."""
    H, W, C = x.shape
    xp = lax.dynamic_update_slice(jnp.zeros((H + 2, W + 2, C), jnp.float32), x, (1, 1, 0))
    acc = jnp.zeros((H, W, C), jnp.float32) + b.reshape(1, 1, C)
    for di in range(3):
        for dj in range(3):
            acc = acc + xp[di:di + H, dj:dj + W, :] * w[di, dj].reshape(1, 1, C)
    return acc


def _dw3x3_pair_roll(x_ext, wa, ba, wb, bb):
    """Two depthwise 3x3 convs sharing one input slab.
    x_ext:(H+2,W,C) already carries the H halo (zeroed at image borders);
    zero padding along W is realised with sublane rolls + border masks instead
    of a padded temp and 9 sublane-crossing slices."""
    Hp_, W, C = x_ext.shape
    H = Hp_ - 2
    n = Hp_ * W
    flat = x_ext.reshape(n, C)                      # W % 8 == 0 -> layout-free
    wi = lax.broadcasted_iota(jnp.int32, (1, W, 1), 1)
    m_l = (wi > 0).astype(jnp.float32)              # zero where w == 0
    m_r = (wi < W - 1).astype(jnp.float32)          # zero where w == W-1
    # out[i] = in[i -/+ 1]; wrapped elements land on masked border columns.
    x_m1 = pltpu.roll(flat, 1, axis=0).reshape(Hp_, W, C) * m_l       # x[h, w-1]
    x_p1 = pltpu.roll(flat, n - 1, axis=0).reshape(Hp_, W, C) * m_r   # x[h, w+1]
    cols = (x_m1, x_ext, x_p1)
    acc_a = jnp.zeros((H, W, C), jnp.float32) + ba.reshape(1, 1, C)
    acc_b = jnp.zeros((H, W, C), jnp.float32) + bb.reshape(1, 1, C)
    for di in range(3):
        for dj in range(3):
            tap = cols[dj][di:di + H]               # leading-axis slice (cheap)
            acc_a = acc_a + tap * wa[di, dj].reshape(1, 1, C)
            acc_b = acc_b + tap * wb[di, dj].reshape(1, 1, C)
    return acc_a, acc_b


# --------------------------- pass 1: x-branch stats ----------------------------
def smfa_stats_kernel(f_ref, w0x_ref, b0x_ref, pool_ref, stats_ref):
    f = f_ref[0]                                    # (TH, W, Cp) bf16
    TH, W, Cp = f.shape
    th8, w8 = TH // DOWN, W // DOWN

    # x-half of linear_0 only (bf16 operands, f32 accumulation)
    x = jnp.dot(f.reshape(TH * W, Cp), w0x_ref[...],
                preferred_element_type=jnp.float32) + b0x_ref[...]     # (n, Cp)

    # adaptive_max_pool2d to (H/8, W/8) == non-overlapping 8x8 max pooling
    p = x.reshape(TH * w8, DOWN, Cp).max(axis=1)            # pool along W
    pool_ref[0] = p.reshape(th8, DOWN, w8, Cp).max(axis=1)  # pool along H

    # per-tile first/second moments for the global unbiased variance
    s = jnp.sum(x, axis=0, keepdims=True)                   # (1, Cp)
    ss = jnp.sum(x * x, axis=0, keepdims=True)              # (1, Cp)
    stats_ref[...] = jnp.concatenate([s, ss], axis=0).reshape(1, 1, 2, Cp)


# ----------------------- pass 2: modulation map t ------------------------------
def smfa_t_kernel(pool_ref, stats_ref, dww_ref, dwb_ref, alpha_ref, belt_ref,
                  w1_ref, b1_ref, t_ref):
    pool = pool_ref[0]                              # (h8, w8, Cp)
    h8, w8, Cp = pool.shape
    npix = h8 * w8 * DOWN * DOWN

    # cross-tile variance reduction folded into this pass (no wrapper kernel)
    st = jnp.sum(stats_ref[0], axis=0)              # (2, Cp)
    s, ss = st[0:1], st[1:2]
    x_v = (ss - s * s / npix) / (npix - 1)          # unbiased, ddof=1

    x_s = _dwconv3x3_zero_pad(pool, dww_ref[...], dwb_ref[...]).reshape(h8 * w8, Cp)
    z = x_s * alpha_ref[...] + x_v * belt_ref[...]
    z = jnp.dot(z.astype(jnp.bfloat16), w1_ref[...],
                preferred_element_type=jnp.float32) + b1_ref[...]
    t_ref[0] = _gelu(z).reshape(h8, w8, Cp)


# -------------------- pass 3: row-tiled main computation -----------------------
def smfa_main_kernel(f_ref, ftop_ref, fbot_ref, t_ref,
                     w0y_ref, b0y_ref, w0x_ref, b0x_ref,
                     l0wa_ref, l0ba_ref, l0wb_ref, l0bb_ref,
                     l1wa_ref, l1wb_ref, l1b_ref, l2w_ref, l2b_ref,
                     w2_ref, b2_ref, o_ref):
    ti = pl.program_id(1)
    nt = pl.num_programs(1)

    f = f_ref[0]                                    # (TH, W, Cp) bf16
    TH, W, Cp = f.shape
    n = TH * W
    f2 = f.reshape(n, Cp)

    # linear_0 split into its y / x halves (two 128-lane matmuls)
    y = jnp.dot(f2, w0y_ref[...], preferred_element_type=jnp.float32) + b0y_ref[...]
    x = jnp.dot(f2, w0x_ref[...], preferred_element_type=jnp.float32) + b0x_ref[...]

    # y at the 3x3-conv halo rows, recomputed from the neighbouring f rows and
    # zeroed at the image border (where the conv zero-pads).
    def halo_row(row_ref, mask):
        r = jnp.dot(row_ref[...].reshape(W, Cp), w0y_ref[...],
                    preferred_element_type=jnp.float32) + b0y_ref[...]
        return (r * mask).reshape(1, W, Cp)

    y_top = halo_row(ftop_ref, jnp.where(ti > 0, 1.0, 0.0))
    y_bot = halo_row(fbot_ref, jnp.where(ti < nt - 1, 1.0, 0.0))
    y_ext = jnp.concatenate([y_top, y.reshape(TH, W, Cp), y_bot], axis=0)  # (TH+2,W,Cp)

    # DMlp grouped 3x3 conv (groups=C, C->2C): two depthwise convs over the
    # same slab (no y_rep copy, no misaligned lane concat).
    y0a, y0b = _dw3x3_pair_roll(y_ext, l0wa_ref[...], l0ba_ref[...],
                                l0wb_ref[...], l0bb_ref[...])
    pre = (jnp.dot(y0a.reshape(n, Cp).astype(jnp.bfloat16), l1wa_ref[...],
                   preferred_element_type=jnp.float32)
           + jnp.dot(y0b.reshape(n, Cp).astype(jnp.bfloat16), l1wb_ref[...],
                     preferred_element_type=jnp.float32)
           + l1b_ref[...])                          # (n, Hp)
    y1 = _gelu(pre)
    y_d = jnp.dot(y1.astype(jnp.bfloat16), l2w_ref[...],
                  preferred_element_type=jnp.float32) + l2b_ref[...]      # (n, Cp)

    # x branch: nearest-neighbour 8x upsample of t folds into the multiply
    # (no (n, Cp) t_up temporary).
    t = t_ref[0]                                    # (th8, w8, Cp)
    th8, w8, _ = t.shape
    t_w = jnp.broadcast_to(t.reshape(th8, w8, 1, Cp),
                           (th8, w8, DOWN, Cp)).reshape(th8, 1, W, Cp)
    x_l = (x.reshape(th8, DOWN, W, Cp) * t_w).reshape(n, Cp)

    # linear_2 on (x_l + y_d)
    out = jnp.dot((x_l + y_d).astype(jnp.bfloat16), w2_ref[...],
                  preferred_element_type=jnp.float32) + b2_ref[...]
    o_ref[0] = out.reshape(TH, W, Cp).astype(o_ref.dtype)


# --------------------------------- wrapper --------------------------------------
def _const_spec(a, grid_rank):
    nd = a.ndim
    if grid_rank == 1:
        return pl.BlockSpec(a.shape, lambda b: (0,) * nd)
    return pl.BlockSpec(a.shape, lambda b, t: (0,) * nd)


def _vmem_ceiling():
    """Generation-aware scoped-VMEM ceiling: ~48 MiB on 64 MiB v7x, up to
    ~96 MiB on 128 MiB v5e/v6e, always leaving headroom for compiler scratch."""
    try:
        cap = pltpu.get_tpu_info().vmem_capacity_bytes
    except Exception:
        cap = 64 << 20
    return int(min(100 << 20, int(cap * 0.75)))


def _pick_tile_h(B, H, W, Cp, Hp, ceiling):
    """Largest multiple of 8 dividing H whose pass-3 f32 working set fits in a
    fraction of the VMEM ceiling; forces >=2 grid points for v7x's two cores."""
    row_bytes = 14 * W * max(Cp, Hp) * 4            # ~14 live f32 slabs per row
    budget_rows = max(DOWN, (ceiling // 3) // row_bytes)
    cands = [c for c in range(DOWN, H + 1, DOWN) if H % c == 0]
    fits = [c for c in cands if c <= budget_rows]
    th = max(fits) if fits else DOWN
    if B * (H // th) < 2:                           # keep both v7x TCs busy
        smaller = [c for c in cands if c < H]
        if smaller:
            th = max(smaller)
    return th


def _vmem_limit(TH, W, Cp, Hp, ceiling):
    tile_bytes = (TH + 2) * W * max(Cp, Hp) * 4
    est = 16 * tile_bytes + (8 << 20)
    return int(min(ceiling, max(32 << 20, est)))


def _pad_last(a, n):
    pad = n - a.shape[-1]
    if pad == 0:
        return a
    return jnp.pad(a, [(0, 0)] * (a.ndim - 1) + [(0, pad)])


def _pad2(a, rows, cols):
    return jnp.pad(a, ((0, rows - a.shape[0]), (0, cols - a.shape[1])))


def smfa_pallas(f_nchw, params, *, tile_h=None):
    # NOTE: the NCHW<->NHWC transposes only exist to match the PyTorch layout.
    nhwc = jnp.transpose(f_nchw, (0, 2, 3, 1)).astype(jnp.float32)
    B, H, W, C = nhwc.shape
    assert H % DOWN == 0 and W % DOWN == 0, "H and W must be multiples of down_scale=8"
    h8, w8 = H // DOWN, W // DOWN

    Cp = _round_up(max(C, 1), LANES)                # lane-padded channel count
    Hp = _round_up(2 * C, LANES)                    # lane-padded hidden (2C)
    ceiling = _vmem_ceiling()

    TH = tile_h if tile_h is not None else _pick_tile_h(B, H, W, Cp, Hp, ceiling)
    assert TH % DOWN == 0 and H % TH == 0, "tile_h must divide H and be a multiple of 8"
    nt = H // TH
    th8 = TH // DOWN

    # ---------------- host-side (trace-time) weight preparation ----------------
    bf16 = jnp.bfloat16
    w0 = params["w0"]                                       # (C, 2C)
    w0y = _pad2(w0[:, :C], Cp, Cp).astype(bf16)
    w0x = _pad2(w0[:, C:], Cp, Cp).astype(bf16)
    b0y = _pad_last(params["b0"][:, :C], Cp)
    b0x = _pad_last(params["b0"][:, C:], Cp)
    w1 = _pad2(params["w1"], Cp, Cp).astype(bf16)
    b1 = _pad_last(params["b1"], Cp)
    w2 = _pad2(params["w2"], Cp, Cp).astype(bf16)
    b2 = _pad_last(params["b2"], Cp)
    dww = _pad_last(params["dww"], Cp)
    dwb = _pad_last(params["dwb"], Cp)
    alpha = _pad_last(params["alpha"], Cp)
    belt = _pad_last(params["belt"], Cp)
    # grouped conv (groups=C, C->2C): torch output channel j reads input j//2;
    # split into the even / odd output-channel sets (both depthwise over y).
    l0w, l0b = params["l0w"], params["l0b"]
    l0wA = _pad_last(l0w[:, :, 0::2], Cp)
    l0wB = _pad_last(l0w[:, :, 1::2], Cp)
    l0bA = _pad_last(l0b[:, 0::2], Cp)
    l0bB = _pad_last(l0b[:, 1::2], Cp)
    l1w = params["l1w"]                                     # (2C, 2C)
    l1wA = _pad2(l1w[0::2, :], Cp, Hp).astype(bf16)
    l1wB = _pad2(l1w[1::2, :], Cp, Hp).astype(bf16)
    l1b = _pad_last(params["l1b"], Hp)
    l2w = _pad2(params["l2w"], Hp, Cp).astype(bf16)
    l2b = _pad_last(params["l2b"], Cp)

    # lane-padded bf16 activations (full-lane DMAs / stores in every pass)
    fp = _pad_last(nhwc, Cp).astype(bf16)                   # (B, H, W, Cp)

    vmem = _vmem_limit(TH, W, Cp, Hp, ceiling)
    cp1 = pltpu.CompilerParams(dimension_semantics=("parallel",),
                               vmem_limit_bytes=vmem)
    cp2 = pltpu.CompilerParams(dimension_semantics=("parallel", "parallel"),
                               vmem_limit_bytes=vmem)

    # ---------------- pass 1: pooled map + variance moments --------------------
    pooled, stats = pl.pallas_call(
        smfa_stats_kernel,
        grid=(B, nt),
        out_shape=[jax.ShapeDtypeStruct((B, h8, w8, Cp), jnp.float32),
                   jax.ShapeDtypeStruct((B, nt, 2, Cp), jnp.float32)],
        in_specs=[pl.BlockSpec((1, TH, W, Cp), lambda b, t: (b, t, 0, 0)),
                  _const_spec(w0x, 2), _const_spec(b0x, 2)],
        out_specs=[pl.BlockSpec((1, th8, w8, Cp), lambda b, t: (b, t, 0, 0)),
                   pl.BlockSpec((1, 1, 2, Cp), lambda b, t: (b, t, 0, 0))],
        compiler_params=cp2,
    )(fp, w0x, b0x)

    # ---------------- pass 2: modulation map t on the (H/8, W/8) grid ----------
    t_map = pl.pallas_call(
        smfa_t_kernel,
        grid=(B,),
        out_shape=jax.ShapeDtypeStruct((B, h8, w8, Cp), jnp.float32),
        in_specs=[pl.BlockSpec((1, h8, w8, Cp), lambda b: (b, 0, 0, 0)),
                  pl.BlockSpec((1, nt, 2, Cp), lambda b: (b, 0, 0, 0)),
                  _const_spec(dww, 1), _const_spec(dwb, 1),
                  _const_spec(alpha, 1), _const_spec(belt, 1),
                  _const_spec(w1, 1), _const_spec(b1, 1)],
        out_specs=pl.BlockSpec((1, h8, w8, Cp), lambda b: (b, 0, 0, 0)),
        compiler_params=cp1,
    )(pooled, stats, dww, dwb, alpha, belt, w1, b1)

    # ---------------- pass 3: row-tiled main computation -----------------------
    out_p = pl.pallas_call(
        smfa_main_kernel,
        grid=(B, nt),
        out_shape=jax.ShapeDtypeStruct((B, H, W, Cp), jnp.float32),
        in_specs=[pl.BlockSpec((1, TH, W, Cp), lambda b, t: (b, t, 0, 0)),
                  # single-row halo blocks (clamped at image borders, masked in-kernel)
                  pl.BlockSpec((1, 1, W, Cp),
                               lambda b, t: (b, jnp.maximum(t * TH - 1, 0), 0, 0)),
                  pl.BlockSpec((1, 1, W, Cp),
                               lambda b, t: (b, jnp.minimum(t * TH + TH, H - 1), 0, 0)),
                  pl.BlockSpec((1, th8, w8, Cp), lambda b, t: (b, t, 0, 0)),
                  _const_spec(w0y, 2), _const_spec(b0y, 2),
                  _const_spec(w0x, 2), _const_spec(b0x, 2),
                  _const_spec(l0wA, 2), _const_spec(l0bA, 2),
                  _const_spec(l0wB, 2), _const_spec(l0bB, 2),
                  _const_spec(l1wA, 2), _const_spec(l1wB, 2), _const_spec(l1b, 2),
                  _const_spec(l2w, 2), _const_spec(l2b, 2),
                  _const_spec(w2, 2), _const_spec(b2, 2)],
        out_specs=pl.BlockSpec((1, TH, W, Cp), lambda b, t: (b, t, 0, 0)),
        compiler_params=cp2,
    )(fp, fp, fp, t_map, w0y, b0y, w0x, b0x,
      l0wA, l0bA, l0wB, l0bB, l1wA, l1wB, l1b, l2w, l2b, w2, b2)

    out = out_p[..., :C]                            # drop the lane padding
    return jnp.transpose(out, (0, 3, 1, 2))         # NHWC -> NCHW


# ------------------------------- parameters -------------------------------------
def make_params(dim, key):
    ks = jax.random.split(key, 16)

    def w(i, shape, s=0.2):
        return s * jax.random.normal(ks[i], shape, jnp.float32)

    return dict(
        w0=w(0, (dim, 2 * dim)),        b0=w(1, (1, 2 * dim), 0.05),
        w1=w(2, (dim, dim)),            b1=w(3, (1, dim), 0.05),
        w2=w(4, (dim, dim)),            b2=w(5, (1, dim), 0.05),
        dww=w(6, (3, 3, dim)),          dwb=w(7, (1, dim), 0.05),
        l0w=w(8, (3, 3, 2 * dim)),      l0b=w(9, (1, 2 * dim), 0.05),
        l1w=w(10, (2 * dim, 2 * dim)),  l1b=w(11, (1, 2 * dim), 0.05),
        l2w=w(12, (2 * dim, dim)),      l2b=w(13, (1, dim), 0.05),
        alpha=1.0 + w(14, (1, dim), 0.1),   # torch init: ones  (perturbed)
        belt=w(15, (1, dim), 0.1),          # torch init: zeros (perturbed)
    )


# ---------------- pure-JAX reference (faithful to the PyTorch math) --------------
def _ref_dw(x, w, b):
    H, W, C = x.shape
    xp = jnp.pad(x, ((1, 1), (1, 1), (0, 0)))
    acc = jnp.zeros((H, W, C), jnp.float32) + b.reshape(1, 1, C)
    for di in range(3):
        for dj in range(3):
            acc = acc + xp[di:di + H, dj:dj + W, :] * w[di, dj].reshape(1, 1, C)
    return acc


def smfa_reference(f_nchw, p):
    f = jnp.transpose(f_nchw, (0, 2, 3, 1)).astype(jnp.float32)
    hi = lax.Precision.HIGHEST

    def one(fb):
        H, W, C = fb.shape
        yx = jnp.einsum("hwc,cd->hwd", fb, p["w0"], precision=hi) + p["b0"][0]
        y, x = yx[..., :C], yx[..., C:]
        x_pool = x.reshape(H // DOWN, DOWN, W // DOWN, DOWN, C).max(axis=(1, 3))
        x_s = _ref_dw(x_pool, p["dww"], p["dwb"][0])
        x_v = jnp.var(x, axis=(0, 1), ddof=1)
        t = x_s * p["alpha"][0] + x_v * p["belt"][0]
        t = jnp.einsum("hwc,cd->hwd", t, p["w1"], precision=hi) + p["b1"][0]
        t = jax.nn.gelu(t, approximate=False)
        t = jnp.repeat(jnp.repeat(t, DOWN, axis=0), DOWN, axis=1)
        x_l = x * t
        y_rep = jnp.repeat(y, 2, axis=-1)
        y0 = _ref_dw(y_rep, p["l0w"], p["l0b"][0])
        y1 = jax.nn.gelu(jnp.einsum("hwc,cd->hwd", y0, p["l1w"], precision=hi)
                         + p["l1b"][0], approximate=False)
        y_d = jnp.einsum("hwc,cd->hwd", y1, p["l2w"], precision=hi) + p["l2b"][0]
        return jnp.einsum("hwc,cd->hwd", x_l + y_d, p["w2"], precision=hi) + p["b2"][0]

    return jnp.transpose(jax.vmap(one)(f), (0, 3, 1, 2))


if __name__ == "__main__":
    B, C, H, W = 2, 4, 16, 16            # H, W multiples of down_scale=8
    f = jax.random.normal(jax.random.PRNGKey(0), (B, C, H, W), jnp.float32)
    params = make_params(C, jax.random.PRNGKey(1))

    ref = jax.block_until_ready(smfa_reference(f, params))

    # tile_h=8 -> two row tiles per image: exercises the halo / tiling path
    out_tiled = jax.block_until_ready(smfa_pallas(f, params, tile_h=8))
    # auto-picked tile height (single tile per image at this toy size)
    out_auto = jax.block_until_ready(smfa_pallas(f, params))

    assert out_tiled.shape == (B, C, H, W)
    assert out_auto.shape == (B, C, H, W)
    err1 = float(jnp.max(jnp.abs(out_tiled - ref)))
    err2 = float(jnp.max(jnp.abs(out_auto - ref)))
    assert err1 < 5e-2, f"tiled kernel max abs error too large: {err1}"
    assert err2 < 5e-2, f"auto-tile kernel max abs error too large: {err2}"
    print("KERNEL_OK")
</pallas_src>

<mosaic_0001>
module attributes {stable_mosaic.version = 11 : i64} {
  func.func @smfa_stats_kernel(%arg0: i32, %arg1: i32, %arg2: memref<1x8x16x128xbf16, #tpu.memory_space<vmem>>, %arg3: memref<128x128xbf16, #tpu.memory_space<vmem>>, %arg4: memref<1x128xf32, #tpu.memory_space<vmem>>, %arg5: memref<1x1x2x128xf32, #tpu.memory_space<vmem>>, %arg6: memref<1x1x2x128xf32, #tpu.memory_space<vmem>>) attributes {dimension_semantics = [#tpu.dimension_semantics<parallel>, #tpu.dimension_semantics<parallel>], iteration_bounds = array<i64: 2, 2>, scalar_prefetch = 0 : i64, scratch_operands = 0 : i64, tpu.core_type = #tpu.core_type<tc>, window_params = [{transform_indices = @transform_0, window_bounds = array<i64: 1, 8, 16, 128>}, {pipeline_mode = #tpu.pipeline_mode<synchronous>, transform_indices = @transform_1, window_bounds = array<i64: 128, 128>}, {pipeline_mode = #tpu.pipeline_mode<synchronous>, transform_indices = @transform_2, window_bounds = array<i64: 1, 128>}, {transform_indices = @transform_3, window_bounds = array<i64: 1, 1, 2, 128>}, {transform_indices = @transform_4, window_bounds = array<i64: 1, 1, 2, 128>}]} {
    %c0 = arith.constant 0 : index
    %c0_0 = arith.constant 0 : index
    %c0_1 = arith.constant 0 : index
    %c0_2 = arith.constant 0 : index
    %0 = vector.load %arg2[%c0, %c0_0, %c0_1, %c0_2] : memref<1x8x16x128xbf16, #tpu.memory_space<vmem>>, vector<1x8x16x128xbf16>
    %1 = vector.shape_cast %0 : vector<1x8x16x128xbf16> to vector<8x16x128xbf16>
    %2 = vector.shape_cast %1 : vector<8x16x128xbf16> to vector<128x128xbf16>
    %c0_3 = arith.constant 0 : index
    %c0_4 = arith.constant 0 : index
    %3 = vector.load %arg3[%c0_3, %c0_4] : memref<128x128xbf16, #tpu.memory_space<vmem>>, vector<128x128xbf16>
    %cst = arith.constant dense<0.000000e+00> : vector<128x128xf32>
    %4 = tpu.matmul %2, %3, %cst {dimension_numbers = #tpu.dot_dimension_numbers<[1], [0], [0], [1], [0, 0, 1, 1], [], []>} : vector<128x128xbf16>, vector<128x128xbf16>, vector<128x128xf32> -> vector<128x128xf32>
    %c0_5 = arith.constant 0 : index
    %c0_6 = arith.constant 0 : index
    %5 = vector.load %arg4[%c0_5, %c0_6] : memref<1x128xf32, #tpu.memory_space<vmem>>, vector<1x128xf32>
    %6 = vector.broadcast %5 : vector<1x128xf32> to vector<128x128xf32>
    %7 = arith.addf %4, %6 : vector<128x128xf32>
    %8 = vector.shape_cast %7 : vector<128x128xf32> to vector<16x8x128xf32>
    %cst_7 = arith.constant dense<0xFF800000> : vector<16x128xf32>
    %9 = vector.multi_reduction <maximumf>, %8, %cst_7 [1] : vector<16x8x128xf32> to vector<16x128xf32>
    %10 = vector.shape_cast %9 : vector<16x128xf32> to vector<1x8x2x128xf32>
    %cst_8 = arith.constant dense<0xFF800000> : vector<1x2x128xf32>
    %11 = vector.multi_reduction <maximumf>, %10, %cst_8 [1] : vector<1x8x2x128xf32> to vector<1x2x128xf32>
    %c0_9 = arith.constant 0 : index
    %c0_10 = arith.constant 0 : index
    %c0_11 = arith.constant 0 : index
    %c0_12 = arith.constant 0 : index
    %12 = vector.load %arg5[%c0_9, %c0_10, %c0_11, %c0_12] : memref<1x1x2x128xf32, #tpu.memory_space<vmem>>, vector<1x1x2x128xf32>
    %13 = vector.shape_cast %12 : vector<1x1x2x128xf32> to vector<1x2x128xf32>
    %14 = vector.shape_cast %11 : vector<1x2x128xf32> to vector<1x1x2x128xf32>
    tpu.vector_store %arg5[%c0_9, %c0_10, %c0_11, %c0_12], %14 {strides = array<i32>} : memref<1x1x2x128xf32, #tpu.memory_space<vmem>>, vector<1x1x2x128xf32>,
    %cst_13 = arith.constant dense<0.000000e+00> : vector<128xf32>
    %15 = vector.multi_reduction <add>, %7, %cst_13 [0] : vector<128x128xf32> to vector<128xf32>
    %16 = vector.shape_cast %15 : vector<128xf32> to vector<1x128xf32>
    %17 = arith.mulf %7, %7 : vector<128x128xf32>
    %cst_14 = arith.constant dense<0.000000e+00> : vector<128xf32>
    %18 = vector.multi_reduction <add>, %17, %cst_14 [0] : vector<128x128xf32> to vector<128xf32>
    %19 = vector.shape_cast %18 : vector<128xf32> to vector<1x128xf32>
    %20 = tpu.concatenate %16, %19 in 0 : vector<1x128xf32>, vector<1x128xf32> -> vector<2x128xf32>
    %21 = vector.shape_cast %20 : vector<2x128xf32> to vector<1x1x2x128xf32>
    %c0_15 = arith.constant 0 : index
    %c0_16 = arith.constant 0 : index
    %c0_17 = arith.constant 0 : index
    %c0_18 = arith.constant 0 : index
    %22 = vector.load %arg6[%c0_15, %c0_16, %c0_17, %c0_18] : memref<1x1x2x128xf32, #tpu.memory_space<vmem>>, vector<1x1x2x128xf32>
    tpu.vector_store %arg6[%c0_15, %c0_16, %c0_17, %c0_18], %21 {strides = array<i32>} : memref<1x1x2x128xf32, #tpu.memory_space<vmem>>, vector<1x1x2x128xf32>,
    return
  }
  func.func @transform_0(%arg0: i32, %arg1: i32) -> (i32, i32, i32, i32) {
    %c0_i32 = arith.constant 0 : i32
    %c0_i32_0 = arith.constant 0 : i32
    %c0_i32_1 = arith.constant 0 : i32
    return %arg0, %arg1, %c0_i32, %c0_i32_0 : i32, i32, i32, i32
  }
  func.func @transform_1(%arg0: i32, %arg1: i32) -> (i32, i32) {
    %c0_i32 = arith.constant 0 : i32
    %c0_i32_0 = arith.constant 0 : i32
    %c0_i32_1 = arith.constant 0 : i32
    return %c0_i32, %c0_i32_0 : i32, i32
  }
  func.func @transform_2(%arg0: i32, %arg1: i32) -> (i32, i32) {
    %c0_i32 = arith.constant 0 : i32
    %c0_i32_0 = arith.constant 0 : i32
    %c0_i32_1 = arith.constant 0 : i32
    return %c0_i32, %c0_i32_0 : i32, i32
  }
  func.func @transform_3(%arg0: i32, %arg1: i32) -> (i32, i32, i32, i32) {
    %c0_i32 = arith.constant 0 : i32
    %c0_i32_0 = arith.constant 0 : i32
    %c0_i32_1 = arith.constant 0 : i32
    return %arg0, %arg1, %c0_i32, %c0_i32_0 : i32, i32, i32, i32
  }
  func.func @transform_4(%arg0: i32, %arg1: i32) -> (i32, i32, i32, i32) {
    %c0_i32 = arith.constant 0 : i32
    %c0_i32_0 = arith.constant 0 : i32
    %c0_i32_1 = arith.constant 0 : i32
    return %arg0, %arg1, %c0_i32, %c0_i32_0 : i32, i32, i32, i32
  }
}

</mosaic_0001>

<llo_original>
// kernel: tpu_custom_call.1
$region0: #{tpu_custom_call.1}
  #allocation0 [shape = 'u32[]', space=smem, size = 0x4, offset = 0x4, fixed_abs, tag = 'smem constant byte address 0x4 - core index']
  #allocation1 [shape = 'u32[144,128]{1,0:T(1,128)}', space=vmem, size = 0x12000, scoped, tag = 'internal scratch']
  %s0 = inlined_call_operand.hbm [shape: bf16[2,16,16,128], index: 0, kind: input, shape index: {}]
  %s1 = inlined_call_operand.hbm [shape: bf16[128,128], index: 1, kind: input, shape index: {}]
  %s2 = inlined_call_operand.vmem [shape: f32[1,128], index: 2, kind: input, shape index: {}]
  %s3 = inlined_call_operand.hbm [shape: f32[2,2,2,128], index: 3, kind: output, shape index: {0}]
  %s4 = inlined_call_operand.hbm [shape: f32[2,2,2,128], index: 4, kind: output, shape index: {1}]
  %5 = xla_tuple %s3, %s4
  %s6 = sld [smem:[#allocation0]]
  $region61: #{tpu_custom_call.1} parent=0
    _
  %s8 = ssub.s32 1, %s6
  %s9 = scalar_select 0, %s8, %s6
  $region1: #{tpu_custom_call.1} parent=0
    #allocation2 [shape = 'u8[65536]{0}', space=vmem, size = 0x10000, scoped, tag = 'input window, operand 0']
    #allocation3 [shape = 's32[2]{0}', space=sflag, size = 0x8, scoped, tag = 'scoped memory for tpu_custom_call.1']
    #allocation4 [shape = 's32[2]{0}', space=sflag, size = 0x8, scoped, tag = 'scoped memory for tpu_custom_call.1']
    #allocation5 [shape = 'u8[32768]{0}', space=vmem, size = 0x8000, scoped, tag = 'input window, operand 1, single buffered']
    #allocation6 [shape = 's32[1]{0}', space=sflag, size = 0x4, scoped, tag = 'scoped memory for tpu_custom_call.1']
    #allocation7 [shape = 'u8[2048]{0}', space=vmem, size = 0x800, scoped, tag = 'output window, operand 0']
    #allocation8 [shape = 'u8[2048]{0}', space=vmem, size = 0x800, scoped, tag = 'output window, operand 1']
    #allocation9 [shape = 's32[2]{0}', space=sflag, size = 0x8, scoped, tag = 'scoped memory for tpu_custom_call.1']
    %10 = vsyncpa [#allocation3], 0
    %s11 = scalar_lea.sflag [#allocation3], 1
    %12 = vsyncpa %s11, 0
    %13 = vsyncpa [#allocation6], 0
    %14 = vsyncpa [#allocation4], 0
    %s15 = scalar_lea.sflag [#allocation4], 1
    %16 = vsyncpa %s15, 0
    %17 = vsyncpa [#allocation9], 0
    %s18 = scalar_lea.sflag [#allocation9], 1
    %19 = vsyncpa %s18, 0
    loop: start=0, step=1, limit=6
    $region2: #{tpu_custom_call.1} parent=1 // loop_pre_header
      _
    $region3: #{tpu_custom_call.1} parent=1 // loop_header
      %s21 = sphi 0, %s25
      %p22 = scmp.ge.s32.totalorder %s21, 6
      %s28 = sphi 0, %s40
      %s29 = sphi 0, %s36
      %s30 = sphi 0, %s28
      %s31 = sphi 0, %s29
      %s32 = sphi 0, %s30
      %s33 = sphi 0, %s31
      %s45 = sphi 0, %s47
      %s48 = sphi 0, %s45
      %s49 = sphi 0, %s48
      %s65 = sphi 0, %s49
      %s69 = sphi 0, %s69
      %s71 = sphi 0, %s69
      %s72 = sphi 0, %s71
      %s86 = sphi 0, %s72
      %s90 = sphi 0, %s90
      %s92 = sphi 0, %s90
      %s93 = sphi 0, %s92
      %s107 = sphi 0, %s93
      %s115 = sphi 0, %s117
      %s118 = sphi 0, %s115
      %s119 = sphi 0, %s118
      %s135 = sphi 0, %s119
      %s143 = sphi 0, %s145
      %s146 = sphi 0, %s143
      %s147 = sphi 0, %s146
      %s163 = sphi 0, %s147
    $region4: #{tpu_custom_call.1} parent=1 // loop_header_branch
      %24 = sbr.rel (%p22) target = $region8
    $region5: #{tpu_custom_call.1} parent=1 // loop_body
      %s26 = ssub.s32 %s21, 1
      %s27 = ssub.s32 %s21, 2
      %s34 = sadd.s32 1, %s29
      %p35 = scmp.ge.s32.totalorder %s34, 2
      %s36 = scalar_select %p35, 0, %s34
      %s37 = sadd.s32 1, %s28
      %s38 = scalar_select %p35, %s37, %s28
      %p39 = scmp.ge.s32.totalorder %s38, 2
      %s40 = scalar_select %p39, 0, %s38
      %s41 = ssub.s32 %s28, %s40
      %s42 = ssub.s32 %s29, %s36
      %s43 = sor.u32 %s41, %s42
      %p44 = scmp.eq.s32.totalorder %s43, 0
      %s46 = sadd.s32 %s45, 1
      %s47 = scalar_select %p44, %s45, %s46
      %p50 = pneg %p44
      %p51 = scmp.eq.s32.totalorder %s21, 3
      %p52 = por %p50, %p51
      %p53 = scmp.ne.s32.totalorder %s45, %s48
      %p54 = scmp.eq.s32.totalorder %s21, 0
      %p55 = por %p53, %p54
      %p56 = scmp.ne.s32.totalorder %s45, %s48
      %p57 = scmp.eq.s32.totalorder %s26, 3
      %p58 = por %p56, %p57
      %p59 = scmp.ne.s32.totalorder %s48, %s49
      %p60 = scmp.eq.s32.totalorder %s26, 0
      %p61 = por %p59, %p60
      %p62 = scmp.ne.s32.totalorder %s48, %s49
      %p63 = scmp.eq.s32.totalorder %s27, 3
      %p64 = por %p62, %p63
      %p66 = scmp.ne.s32.totalorder %s49, %s65
      %p67 = scmp.eq.s32.totalorder %s27, 0
      %p68 = por %p66, %p67
      %s70 = sadd.s32 %s69, 1
      %p73 = scmp.eq.s32.totalorder %s21, 3
      %p74 = scmp.ne.s32.totalorder %s69, %s71
      %p75 = scmp.eq.s32.totalorder %s21, 0
      %p76 = por %p74, %p75
      %p77 = scmp.ne.s32.totalorder %s69, %s71
      %p78 = scmp.eq.s32.totalorder %s26, 3
      %p79 = por %p77, %p78
      %p80 = scmp.ne.s32.totalorder %s71, %s72
      %p81 = scmp.eq.s32.totalorder %s26, 0
      %p82 = por %p80, %p81
      %p83 = scmp.ne.s32.totalorder %s71, %s72
      %p84 = scmp.eq.s32.totalorder %s27, 3
      %p85 = por %p83, %p84
      %p87 = scmp.ne.s32.totalorder %s72, %s86
      %p88 = scmp.eq.s32.totalorder %s27, 0
      %p89 = por %p87, %p88
      %s91 = sadd.s32 %s90, 1
      %p94 = scmp.eq.s32.totalorder %s21, 3
      %p95 = scmp.ne.s32.totalorder %s90, %s92
      %p96 = scmp.eq.s32.totalorder %s21, 0
      %p97 = por %p95, %p96
      %p98 = scmp.ne.s32.totalorder %s90, %s92
      %p99 = scmp.eq.s32.totalorder %s26, 3
      %p100 = por %p98, %p99
      %p101 = scmp.ne.s32.totalorder %s92, %s93
      %p102 = scmp.eq.s32.totalorder %s26, 0
      %p103 = por %p101, %p102
      %p104 = scmp.ne.s32.totalorder %s92, %s93
      %p105 = scmp.eq.s32.totalorder %s27, 3
      %p106 = por %p104, %p105
      %p108 = scmp.ne.s32.totalorder %s93, %s107
      %p109 = scmp.eq.s32.totalorder %s27, 0
      %p110 = por %p108, %p109
      %s111 = ssub.s32 %s28, %s40
      %s112 = ssub.s32 %s29, %s36
      %s113 = sor.u32 %s111, %s112
      %p114 = scmp.eq.s32.totalorder %s113, 0
      %s116 = sadd.s32 %s115, 1
      %s117 = scalar_select %p114, %s115, %s116
      %p120 = pneg %p114
      %p121 = scmp.eq.s32.totalorder %s21, 3
      %p122 = por %p120, %p121
      %p123 = scmp.ne.s32.totalorder %s115, %s118
      %p124 = scmp.eq.s32.totalorder %s21, 0
      %p125 = por %p123, %p124
      %p126 = scmp.ne.s32.totalorder %s115, %s118
      %p127 = scmp.eq.s32.totalorder %s26, 3
      %p128 = por %p126, %p127
      %p129 = scmp.ne.s32.totalorder %s118, %s119
      %p130 = scmp.eq.s32.totalorder %s26, 0
      %p131 = por %p129, %p130
      %p132 = scmp.ne.s32.totalorder %s118, %s119
      %p133 = scmp.eq.s32.totalorder %s27, 3
      %p134 = por %p132, %p133
      %p136 = scmp.ne.s32.totalorder %s119, %s135
      %p137 = scmp.eq.s32.totalorder %s27, 0
      %p138 = por %p136, %p137
      %s139 = ssub.s32 %s28, %s40
      %s140 = ssub.s32 %s29, %s36
      %s141 = sor.u32 %s139, %s140
      %p142 = scmp.eq.s32.totalorder %s141, 0
      %s144 = sadd.s32 %s143, 1
      %s145 = scalar_select %p142, %s143, %s144
      %p148 = pneg %p142
      %p149 = scmp.eq.s32.totalorder %s21, 3
      %p150 = por %p148, %p149
      %p151 = scmp.ne.s32.totalorder %s143, %s146
      %p152 = scmp.eq.s32.totalorder %s21, 0
      %p153 = por %p151, %p152
      %p154 = scmp.ne.s32.totalorder %s143, %s146
      %p155 = scmp.eq.s32.totalorder %s26, 3
      %p156 = por %p154, %p155
      %p157 = scmp.ne.s32.totalorder %s146, %s147
      %p158 = scmp.eq.s32.totalorder %s26, 0
      %p159 = por %p157, %p158
      %p160 = scmp.ne.s32.totalorder %s146, %s147
      %p161 = scmp.eq.s32.totalorder %s27, 3
      %p162 = por %p160, %p161
      %p164 = scmp.ne.s32.totalorder %s147, %s163
      %p165 = scmp.eq.s32.totalorder %s27, 0
      %p166 = por %p164, %p165
      %p167 = scmp.le.s32.totalorder 1, %s21
      %p168 = scmp.lt.s32.totalorder %s21, 5
      %p169 = pnand %p167, %p168
      %p170 = pneg %p169
      // Predicated region
      $region9: #{tpu_custom_call.1} parent=5 // pred_check
        _
      $region10: #{tpu_custom_call.1} parent=5 // pred_check_branch
        %172 = sbr.rel (%p169) target = $region12
      $region11: #{tpu_custom_call.1} parent=5 // pred_region
        %s173 = ssub.s32 %s21, 1
        // Predicated region
        $region13: #{tpu_custom_call.1} parent=11 // pred_check
          %p174 = pneg %p82
        $region14: #{tpu_custom_call.1} parent=11 // pred_check_branch
          %176 = sbr.rel (%p174) target = $region16
        $region15: #{tpu_custom_call.1} parent=11 // pred_region
          %s178 = ssub.s32 1024, 1024
          %179 = vsyncadd [#allocation6], %s178
          %s180 = sshll.u32 [#allocation5], 4
          %s181 = int_to_ptr.vmem [resolvable:$true] %s180
          %186 = dma.hbm_to_vmem [thread:$0]  %s1, 1024, %s181, [#allocation6], 64, 64, 4
        $region16: #{tpu_custom_call.1} parent=11 // pred_fallthru
          _
        // Predicated region
        $region17: #{tpu_custom_call.1} parent=11 // pred_check
          %p187 = pneg %p103
        $region18: #{tpu_custom_call.1} parent=11 // pred_check_branch
          %189 = sbr.rel (%p187) target = $region20
        $region19: #{tpu_custom_call.1} parent=11 // pred_region
          _
        $region20: #{tpu_custom_call.1} parent=11 // pred_fallthru
          _
      $region12: #{tpu_custom_call.1} parent=5 // pred_fallthru
        _
      %p190 = scmp.lt.s32.totalorder %s21, 4
      // Predicated region
      $region21: #{tpu_custom_call.1} parent=5 // pred_check
        %p191 = pneg %p190
      $region22: #{tpu_custom_call.1} parent=5 // pred_check_branch
        %193 = sbr.rel (%p191) target = $region24
      $region23: #{tpu_custom_call.1} parent=5 // pred_region
        // Predicated region
        $region25: #{tpu_custom_call.1} parent=23 // pred_check
          %p194 = pneg %p55
        $region26: #{tpu_custom_call.1} parent=23 // pred_check_branch
          %196 = sbr.rel (%p194) target = $region28
        $region27: #{tpu_custom_call.1} parent=23 // pred_region
          %s197 = sand.u32 %s45, 1
          %s198 = scalar_lea.sflag [#allocation3], %s197
          %s199 = sand.u32 %s45, 1
          %s200 = smul.addr %s199, 64
          %s201 = scalar_lea.vmem [#allocation2], %s200
          %s202 = smul.u32 8, %s29
          %s204 = ssub.s32 1024, 1024
          %205 = vsyncadd %s198, %s204
          %s206 = smul.addr %s202, 2
          %s207 = smul.addr %s28, 32
          %s208 = sadd.s32 %s206, %s207
          %s209 = smul.addr %s208, 64
          %s210 = scalar_lea.hbm %s0, %s209
          %s211 = sshll.u32 %s201, 4
          %s212 = int_to_ptr.vmem [resolvable:$true] %s211
          %217 = dma.hbm_to_vmem [thread:$0]  %s210, 1024, %s212, %s198, 64, 64, 4
        $region28: #{tpu_custom_call.1} parent=23 // pred_fallthru
          _
      $region24: #{tpu_custom_call.1} parent=5 // pred_fallthru
        _
      %p218 = scmp.le.s32.totalorder 1, %s21
      %p219 = scmp.lt.s32.totalorder %s21, 5
      %p220 = pnand %p218, %p219
      %p221 = pneg %p220
      // Predicated region
      $region29: #{tpu_custom_call.1} parent=5 // pred_check
        _
      $region30: #{tpu_custom_call.1} parent=5 // pred_check_branch
        %223 = sbr.rel (%p220) target = $region32
      $region31: #{tpu_custom_call.1} parent=5 // pred_region
        %s224 = ssub.s32 %s21, 1
        %s225 = sand.u32 %s48, 1
        %s226 = scalar_lea.sflag [#allocation3], %s225
        %s227 = sand.u32 %s48, 1
        %s228 = smul.addr %s227, 64
        %s229 = scalar_lea.vmem [#allocation2], %s228
        // Predicated region
        $region33: #{tpu_custom_call.1} parent=31 // pred_check
          %p230 = pneg %p61
        $region34: #{tpu_custom_call.1} parent=31 // pred_check_branch
          %232 = sbr.rel (%p230) target = $region36
        $region35: #{tpu_custom_call.1} parent=31 // pred_region
          %233 = dma.done %s226, 1024
        $region36: #{tpu_custom_call.1} parent=31 // pred_fallthru
          _
        // Predicated region
        $region37: #{tpu_custom_call.1} parent=31 // pred_check
          %p234 = pneg %p82
        $region38: #{tpu_custom_call.1} parent=31 // pred_check_branch
          %236 = sbr.rel (%p234) target = $region40
        $region39: #{tpu_custom_call.1} parent=31 // pred_region
          %237 = dma.done [#allocation6], 1024
        $region40: #{tpu_custom_call.1} parent=31 // pred_fallthru
          _
        %s238 = sand.u32 %s48, 1
        %s239 = scalar_lea.sflag [#allocation3], %s238
        %s240 = sand.u32 %s48, 1
        %s241 = smul.addr %s240, 64
        %s242 = scalar_lea.vmem [#allocation2], %s241
        %p243 = pneg %p61
        %p244 = pneg %p58
        %p245 = pneg %p82
        %p246 = pneg %p79
        %p247 = pneg %p103
        %p248 = pneg %p100
        %p249 = pneg %p131
        %p250 = pneg %p128
        %s251 = sand.u32 %s118, 1
        %s252 = scalar_lea.sflag [#allocation4], %s251
        %s253 = sand.u32 %s118, 1
        %s254 = smul.addr %s253, 2
        %s255 = scalar_lea.vmem [#allocation7], %s254
        %p256 = pneg %p159
        %p257 = pneg %p156
        %s258 = sand.u32 %s146, 1
        %s259 = scalar_lea.sflag [#allocation9], %s258
        %s260 = sand.u32 %s146, 1
        %s261 = smul.addr %s260, 2
        %s262 = scalar_lea.vmem [#allocation8], %s261
        %s263 = smul.u32 8, %s31
        %v265 = vld [vmem:[%s229] sm:$0xf]
        %v266 = vld [vmem:[%s229 + $0x4] sm:$0xf]
        %v267 = vld [vmem:[%s229 + $0x8] sm:$0xf]
        %v268 = vld [vmem:[%s229 + $0xc] sm:$0xf]
        %v269 = vld [vmem:[%s229 + $0x10] sm:$0xf]
        %v270 = vld [vmem:[%s229 + $0x14] sm:$0xf]
        %v271 = vld [vmem:[%s229 + $0x18] sm:$0xf]
        %v272 = vld [vmem:[%s229 + $0x1c] sm:$0xf]
        %v273 = vld [vmem:[%s229 + $0x20] sm:$0xf]
        %v274 = vld [vmem:[%s229 + $0x24] sm:$0xf]
        %v275 = vld [vmem:[%s229 + $0x28] sm:$0xf]
        %v276 = vld [vmem:[%s229 + $0x2c] sm:$0xf]
        %v277 = vld [vmem:[%s229 + $0x30] sm:$0xf]
        %v278 = vld [vmem:[%s229 + $0x34] sm:$0xf]
        %v279 = vld [vmem:[%s229 + $0x38] sm:$0xf]
        %v280 = vld [vmem:[%s229 + $0x3c] sm:$0xf]
        %v281 = vld [vmem:[#allocation5] sm:$0xf]
        %v282 = vld [vmem:[#allocation5 + $0x4] sm:$0xf]
        %v283 = vld [vmem:[#allocation5 + $0x8] sm:$0xf]
        %v284 = vld [vmem:[#allocation5 + $0xc] sm:$0xf]
        %v285 = vld [vmem:[#allocation5 + $0x10] sm:$0xf]
        %v286 = vld [vmem:[#allocation5 + $0x14] sm:$0xf]
        %v287 = vld [vmem:[#allocation5 + $0x18] sm:$0xf]
        %v288 = vld [vmem:[#allocation5 + $0x1c] sm:$0xf]
        %v289 = vld [vmem:[#allocation5 + $0x20] sm:$0xf]
        %v290 = vld [vmem:[#allocation5 + $0x24] sm:$0xf]
        %v291 = vld [vmem:[#allocation5 + $0x28] sm:$0xf]
        %v292 = vld [vmem:[#allocation5 + $0x2c] sm:$0xf]
        %v293 = vld [vmem:[#allocation5 + $0x30] sm:$0xf]
        %v294 = vld [vmem:[#allocation5 + $0x34] sm:$0xf]
        %v295 = vld [vmem:[#allocation5 + $0x38] sm:$0xf]
        %v296 = vld [vmem:[#allocation5 + $0x3c] sm:$0xf]
        %v297 = vld [vmem:[%s2] sm:$0x1]
        %v299 = vlaneseq
        %v300 = vshrl.u32 %v299, 7
        %v301 = vsub.s32 0, %v300
        %v302 = vrot.slane %v297, %v301
        %v320 = vunpack.c.l.b16 %v265
        %v321 = vunpack.c.l.b16 %v266
        %v322 = vunpack.c.l.b16 %v267
        %v323 = vunpack.c.l.b16 %v268
        %v324 = vunpack.c.l.b16 %v269
        %v325 = vunpack.c.l.b16 %v270
        %v326 = vunpack.c.l.b16 %v271
        %v327 = vunpack.c.l.b16 %v272
        %v328 = vunpack.c.l.b16 %v273
        %v329 = vunpack.c.l.b16 %v274
        %v330 = vunpack.c.l.b16 %v275
        %v331 = vunpack.c.l.b16 %v276
        %v332 = vunpack.c.l.b16 %v277
        %v333 = vunpack.c.l.b16 %v278
        %v334 = vunpack.c.l.b16 %v279
        %v335 = vunpack.c.l.b16 %v280
        %v336 = vpack.c.b16 %v321, %v320
        %v337 = vpack.c.b16 %v323, %v322
        %v338 = vpack.c.b16 %v325, %v324
        %v339 = vpack.c.b16 %v327, %v326
        %v340 = vpack.c.b16 %v329, %v328
        %v341 = vpack.c.b16 %v331, %v330
        %v342 = vpack.c.b16 %v333, %v332
        %v343 = vpack.c.b16 %v335, %v334
        %v368 = vunpack.c.l.b16 %v281
        %v369 = vunpack.c.l.b16 %v282
        %v370 = vunpack.c.l.b16 %v283
        %v371 = vunpack.c.l.b16 %v284
        %v372 = vunpack.c.l.b16 %v285
        %v373 = vunpack.c.l.b16 %v286
        %v374 = vunpack.c.l.b16 %v287
        %v375 = vunpack.c.l.b16 %v288
        %v376 = vunpack.c.l.b16 %v289
        %v377 = vunpack.c.l.b16 %v290
        %v378 = vunpack.c.l.b16 %v291
        %v379 = vunpack.c.l.b16 %v292
        %v380 = vunpack.c.l.b16 %v293
        %v381 = vunpack.c.l.b16 %v294
        %v382 = vunpack.c.l.b16 %v295
        %v383 = vunpack.c.l.b16 %v296
        %v384 = vpack.c.b16 %v369, %v368
        %v385 = vpack.c.b16 %v371, %v370
        %v386 = vpack.c.b16 %v373, %v372
        %v387 = vpack.c.b16 %v375, %v374
        %v388 = vpack.c.b16 %v377, %v376
        %v389 = vpack.c.b16 %v379, %v378
        %v390 = vpack.c.b16 %v381, %v380
        %v391 = vpack.c.b16 %v383, %v382
        %400 = vmatprep.subr.bf16.mxu0 0
        %401 = vmatpush1.bf16.msra.mxu0 %v384
        %402 = vmatprep.subr.bf16.mxu0 0
        %403 = vmatpush1.bf16.msra.mxu0 %v385
        %404 = vmatprep.subr.bf16.mxu0 0
        %405 = vmatpush1.bf16.msra.mxu0 %v386
        %406 = vmatprep.subr.bf16.mxu0 0
        %407 = vmatpush1.bf16.msra.mxu0 %v387
        %408 = vmatprep.subr.bf16.mxu0 0
        %409 = vmatpush1.bf16.msra.mxu0 %v388
        %410 = vmatprep.subr.bf16.mxu0 0
        %411 = vmatpush1.bf16.msra.mxu0 %v389
        %412 = vmatprep.subr.bf16.mxu0 0
        %413 = vmatpush1.bf16.msra.mxu0 %v390
        %414 = vmatprep.subr.bf16.mxu0 0
        %415 = vmatpush1.bf16.msra.mxu0 %v391
        %416 = vmatprep.subr.bf16.mxu0 0
        %417 = vmatpush1.bf16.msra.mxu0 0
        %418 = vmatprep.subr.bf16.mxu0 0
        %419 = vmatpush1.bf16.msra.mxu0 0
        %420 = vmatprep.subr.bf16.mxu0 0
        %421 = vmatpush1.bf16.msra.mxu0 0
        %422 = vmatprep.subr.bf16.mxu0 0
        %423 = vmatpush1.bf16.msra.mxu0 0
        %424 = vmatprep.subr.bf16.mxu0 0
        %425 = vmatpush1.bf16.msra.mxu0 0
        %426 = vmatprep.subr.bf16.mxu0 0
        %427 = vmatpush1.bf16.msra.mxu0 0
        %428 = vmatprep.subr.bf16.mxu0 0
        %429 = vmatpush1.bf16.msra.mxu0 0
        %430 = vmatprep.subr.bf16.mxu0 0
        %431 = vmatpush1.bf16.msra.mxu0 0
        %432 = vmatprep.mubr.bf16.mxu0 0
        %433 = vmatmul.mubr.bf16.gmra.mrb[0].mxu0 %v336
        %v434 = vpop.f32.mrb[0].mxu0
        %v435 = vadd.f32 %v302, %v434
        %v436 = vpop.f32.mrb[0].mxu0
        %v437 = vpop.f32.mrb[0].mxu0
        %v438 = vadd.f32 %v302, %v437
        %v439 = vpop.f32.mrb[0].mxu0
        %440 = vmatprep.mubr.bf16.mxu0 0
        %441 = vmatmul.mubr.bf16.gmra.mrb[0].mxu0 %v337
        %v442 = vpop.f32.mrb[0].mxu0
        %v443 = vadd.f32 %v302, %v442
        %v444 = vpop.f32.mrb[0].mxu0
        %v445 = vpop.f32.mrb[0].mxu0
        %v446 = vadd.f32 %v302, %v445
        %v447 = vpop.f32.mrb[0].mxu0
        %448 = vmatprep.mubr.bf16.mxu0 0
        %449 = vmatmul.mubr.bf16.gmra.mrb[0].mxu0 %v338
        %v450 = vpop.f32.mrb[0].mxu0
        %v451 = vadd.f32 %v302, %v450
        %v452 = vpop.f32.mrb[0].mxu0
        %v453 = vpop.f32.mrb[0].mxu0
        %v454 = vadd.f32 %v302, %v453
        %v455 = vpop.f32.mrb[0].mxu0
        %456 = vmatprep.mubr.bf16.mxu0 0
        %457 = vmatmul.mubr.bf16.gmra.mrb[0].mxu0 %v339
        %v458 = vpop.f32.mrb[0].mxu0
        %v459 = vadd.f32 %v302, %v458
        %v460 = vpop.f32.mrb[0].mxu0
        %v461 = vpop.f32.mrb[0].mxu0
        %v462 = vadd.f32 %v302, %v461
        %v463 = vpop.f32.mrb[0].mxu0
        %464 = vmatprep.mubr.bf16.mxu0 0
        %465 = vmatmul.mubr.bf16.gmra.mrb[0].mxu0 %v340
        %v466 = vpop.f32.mrb[0].mxu0
        %v467 = vadd.f32 %v302, %v466
        %v468 = vpop.f32.mrb[0].mxu0
        %v469 = vpop.f32.mrb[0].mxu0
        %v470 = vadd.f32 %v302, %v469
        %v471 = vpop.f32.mrb[0].mxu0
        %472 = vmatprep.mubr.bf16.mxu0 0
        %473 = vmatmul.mubr.bf16.gmra.mrb[0].mxu0 %v341
        %v474 = vpop.f32.mrb[0].mxu0
        %v475 = vadd.f32 %v302, %v474
        %v476 = vpop.f32.mrb[0].mxu0
        %v477 = vpop.f32.mrb[0].mxu0
        %v478 = vadd.f32 %v302, %v477
        %v479 = vpop.f32.mrb[0].mxu0
        %480 = vmatprep.mubr.bf16.mxu0 0
        %481 = vmatmul.mubr.bf16.gmra.mrb[0].mxu0 %v342
        %v482 = vpop.f32.mrb[0].mxu0
        %v483 = vadd.f32 %v302, %v482
        %v484 = vpop.f32.mrb[0].mxu0
        %v485 = vpop.f32.mrb[0].mxu0
        %v486 = vadd.f32 %v302, %v485
        %v487 = vpop.f32.mrb[0].mxu0
        %488 = vmatprep.mubr.bf16.mxu0 0
        %489 = vmatmul.mubr.bf16.gmra.mrb[0].mxu0 %v343
        %v490 = vpop.f32.mrb[0].mxu0
        %v491 = vadd.f32 %v302, %v490
        %v492 = vpop.f32.mrb[0].mxu0
        %v493 = vpop.f32.mrb[0].mxu0
        %v494 = vadd.f32 %v302, %v493
        %v495 = vpop.f32.mrb[0].mxu0
        %496 = vdwg.mxu0
        %v497 = vrot.slane %v435, 4
        %v498 = vmax.f32 %v435, %v497
        %v499 = vrot.slane %v498, 2
        %v500 = vmax.f32 %v498, %v499
        %v501 = vrot.slane %v500, 1
        %v502 = vmax.f32 %v500, %v501
        %v503 = vrot.slane %v438, 4
        %v504 = vmax.f32 %v438, %v503
        %v505 = vrot.slane %v504, 2
        %v506 = vmax.f32 %v504, %v505
        %v507 = vrot.slane %v506, 1
        %v508 = vmax.f32 %v506, %v507
        %v509 = vrot.slane %v443, 4
        %v510 = vmax.f32 %v443, %v509
        %v511 = vrot.slane %v510, 2
        %v512 = vmax.f32 %v510, %v511
        %v513 = vrot.slane %v512, 1
        %v514 = vmax.f32 %v512, %v513
        %v515 = vrot.slane %v446, 4
        %v516 = vmax.f32 %v446, %v515
        %v517 = vrot.slane %v516, 2
        %v518 = vmax.f32 %v516, %v517
        %v519 = vrot.slane %v518, 1
        %v520 = vmax.f32 %v518, %v519
        %v521 = vrot.slane %v451, 4
        %v522 = vmax.f32 %v451, %v521
        %v523 = vrot.slane %v522, 2
        %v524 = vmax.f32 %v522, %v523
        %v525 = vrot.slane %v524, 1
        %v526 = vmax.f32 %v524, %v525
        %v527 = vrot.slane %v454, 4
        %v528 = vmax.f32 %v454, %v527
        %v529 = vrot.slane %v528, 2
        %v530 = vmax.f32 %v528, %v529
        %v531 = vrot.slane %v530, 1
        %v532 = vmax.f32 %v530, %v531
        %v533 = vrot.slane %v459, 4
        %v534 = vmax.f32 %v459, %v533
        %v535 = vrot.slane %v534, 2
        %v536 = vmax.f32 %v534, %v535
        %v537 = vrot.slane %v536, 1
        %v538 = vmax.f32 %v536, %v537
        %v539 = vrot.slane %v462, 4
        %v540 = vmax.f32 %v462, %v539
        %v541 = vrot.slane %v540, 2
        %v542 = vmax.f32 %v540, %v541
        %v543 = vrot.slane %v542, 1
        %v544 = vmax.f32 %v542, %v543
        %v545 = vrot.slane %v467, 4
        %v546 = vmax.f32 %v467, %v545
        %v547 = vrot.slane %v546, 2
        %v548 = vmax.f32 %v546, %v547
        %v549 = vrot.slane %v548, 1
        %v550 = vmax.f32 %v548, %v549
        %v551 = vrot.slane %v470, 4
        %v552 = vmax.f32 %v470, %v551
        %v553 = vrot.slane %v552, 2
        %v554 = vmax.f32 %v552, %v553
        %v555 = vrot.slane %v554, 1
        %v556 = vmax.f32 %v554, %v555
        %v557 = vrot.slane %v475, 4
        %v558 = vmax.f32 %v475, %v557
        %v559 = vrot.slane %v558, 2
        %v560 = vmax.f32 %v558, %v559
        %v561 = vrot.slane %v560, 1
        %v562 = vmax.f32 %v560, %v561
        %v563 = vrot.slane %v478, 4
        %v564 = vmax.f32 %v478, %v563
        %v565 = vrot.slane %v564, 2
        %v566 = vmax.f32 %v564, %v565
        %v567 = vrot.slane %v566, 1
        %v568 = vmax.f32 %v566, %v567
        %v569 = vrot.slane %v483, 4
        %v570 = vmax.f32 %v483, %v569
        %v571 = vrot.slane %v570, 2
        %v572 = vmax.f32 %v570, %v571
        %v573 = vrot.slane %v572, 1
        %v574 = vmax.f32 %v572, %v573
        %v575 = vrot.slane %v486, 4
        %v576 = vmax.f32 %v486, %v575
        %v577 = vrot.slane %v576, 2
        %v578 = vmax.f32 %v576, %v577
        %v579 = vrot.slane %v578, 1
        %v580 = vmax.f32 %v578, %v579
        %v581 = vrot.slane %v491, 4
        %v582 = vmax.f32 %v491, %v581
        %v583 = vrot.slane %v582, 2
        %v584 = vmax.f32 %v582, %v583
        %v585 = vrot.slane %v584, 1
        %v586 = vmax.f32 %v584, %v585
        %v587 = vrot.slane %v494, 4
        %v588 = vmax.f32 %v494, %v587
        %v589 = vrot.slane %v588, 2
        %v590 = vmax.f32 %v588, %v589
        %v591 = vrot.slane %v590, 1
        %v592 = vmax.f32 %v590, %v591
        %v593 = vmax.f32 %v502, %v526
        %v594 = vmax.f32 %v514, %v538
        %v595 = vmax.f32 %v593, %v550
        %v596 = vmax.f32 %v594, %v562
        %v597 = vmax.f32 %v595, %v574
        %v598 = vmax.f32 %v596, %v586
        %v599 = vmax.f32 %v597, %v598
        %v600 = vmax.f32 %v508, %v532
        %v601 = vmax.f32 %v520, %v544
        %v602 = vmax.f32 %v600, %v556
        %v603 = vmax.f32 %v601, %v568
        %v604 = vmax.f32 %v602, %v580
        %v605 = vmax.f32 %v603, %v592
        %v606 = vmax.f32 %v604, %v605
        %vm609 = vcmask 1041409
        %v610 = vsel %vm609, %v606, %v599
        %612 = vst [vmem:[%s255] sm:$0x3] %v610
        %v613 = vadd.f32 %v435, %v438
        %v614 = vadd.f32 %v613, %v443
        %v615 = vadd.f32 %v614, %v446
        %v616 = vadd.f32 %v615, %v451
        %v617 = vadd.f32 %v616, %v454
        %v618 = vadd.f32 %v617, %v459
        %v619 = vadd.f32 %v618, %v462
        %v620 = vadd.f32 %v619, %v467
        %v621 = vadd.f32 %v620, %v470
        %v622 = vadd.f32 %v621, %v475
        %v623 = vadd.f32 %v622, %v478
        %v624 = vadd.f32 %v623, %v483
        %v625 = vadd.f32 %v624, %v486
        %v626 = vadd.f32 %v625, %v491
        %v627 = vadd.f32 %v626, %v494
        %v628 = vrot.slane %v627, 4
        %v629 = vadd.f32 %v627, %v628
        %v630 = vrot.slane %v629, 2
        %v631 = vadd.f32 %v629, %v630
        %v632 = vrot.slane %v631, 1
        %v633 = vadd.f32 %v631, %v632
        %v634 = vmul.f32 %v435, %v435
        %v635 = vmul.f32 %v438, %v438
        %v636 = vmul.f32 %v443, %v443
        %v637 = vmul.f32 %v446, %v446
        %v638 = vmul.f32 %v451, %v451
        %v639 = vmul.f32 %v454, %v454
        %v640 = vmul.f32 %v459, %v459
        %v641 = vmul.f32 %v462, %v462
        %v642 = vmul.f32 %v467, %v467
        %v643 = vmul.f32 %v470, %v470
        %v644 = vmul.f32 %v475, %v475
        %v645 = vmul.f32 %v478, %v478
        %v646 = vmul.f32 %v483, %v483
        %v647 = vmul.f32 %v486, %v486
        %v648 = vmul.f32 %v491, %v491
        %v649 = vmul.f32 %v494, %v494
        %v650 = vadd.f32 %v634, %v635
        %v651 = vadd.f32 %v650, %v636
        %v652 = vadd.f32 %v651, %v637
        %v653 = vadd.f32 %v652, %v638
        %v654 = vadd.f32 %v653, %v639
        %v655 = vadd.f32 %v654, %v640
        %v656 = vadd.f32 %v655, %v641
        %v657 = vadd.f32 %v656, %v642
        %v658 = vadd.f32 %v657, %v643
        %v659 = vadd.f32 %v658, %v644
        %v660 = vadd.f32 %v659, %v645
        %v661 = vadd.f32 %v660, %v646
        %v662 = vadd.f32 %v661, %v647
        %v663 = vadd.f32 %v662, %v648
        %v664 = vadd.f32 %v663, %v649
        %v665 = vrot.slane %v664, 4
        %v666 = vadd.f32 %v664, %v665
        %v667 = vrot.slane %v666, 2
        %v668 = vadd.f32 %v666, %v667
        %v669 = vrot.slane %v668, 1
        %v670 = vadd.f32 %v668, %v669
        %vm671 = vcmask 1040384
        %v672 = vsel %vm671, %v633, %v670
        %673 = vst [vmem:[%s262] sm:$0x3] %v672
        %s674 = sand.u32 %s118, 1
        %s675 = scalar_lea.sflag [#allocation4], %s674
        %s676 = sand.u32 %s118, 1
        %s677 = smul.addr %s676, 2
        %s678 = scalar_lea.vmem [#allocation7], %s677
        %s679 = sand.u32 %s146, 1
        %s680 = scalar_lea.sflag [#allocation9], %s679
        %s681 = sand.u32 %s146, 1
        %s682 = smul.addr %s681, 2
        %s683 = scalar_lea.vmem [#allocation8], %s682
        // Predicated region
        $region41: #{tpu_custom_call.1} parent=31 // pred_check
          %p684 = pneg %p128
        $region42: #{tpu_custom_call.1} parent=31 // pred_check_branch
          %686 = sbr.rel (%p684) target = $region44
        $region43: #{tpu_custom_call.1} parent=31 // pred_region
          %s688 = ssub.s32 32, 32
          %689 = vsyncadd %s675, %s688
          %s690 = smul.addr %s30, 2
          %s691 = sadd.s32 %s31, %s690
          %s692 = smul.addr %s691, 32
          %s693 = scalar_lea.hbm %s3, %s692
          %s695 = sshll.u32 %s678, 4
          %s696 = int_to_ptr.vmem [resolvable:$true] %s695
          %698 = dma.vmem_to_hbm [thread:$0]  %s696, 32, %s693, %s675
        $region44: #{tpu_custom_call.1} parent=31 // pred_fallthru
          _
        // Predicated region
        $region45: #{tpu_custom_call.1} parent=31 // pred_check
          %p699 = pneg %p156
        $region46: #{tpu_custom_call.1} parent=31 // pred_check_branch
          %701 = sbr.rel (%p699) target = $region48
        $region47: #{tpu_custom_call.1} parent=31 // pred_region
          %s703 = ssub.s32 32, 32
          %704 = vsyncadd %s680, %s703
          %s705 = smul.addr %s30, 2
          %s706 = sadd.s32 %s31, %s705
          %s707 = smul.addr %s706, 32
          %s708 = scalar_lea.hbm %s4, %s707
          %s710 = sshll.u32 %s683, 4
          %s711 = int_to_ptr.vmem [resolvable:$true] %s710
          %713 = dma.vmem_to_hbm [thread:$0]  %s711, 32, %s708, %s680
        $region48: #{tpu_custom_call.1} parent=31 // pred_fallthru
          _
      $region32: #{tpu_custom_call.1} parent=5 // pred_fallthru
        _
      %p714 = scmp.le.s32.totalorder 2, %s21
      // Predicated region
      $region49: #{tpu_custom_call.1} parent=5 // pred_check
        %p715 = pneg %p714
      $region50: #{tpu_custom_call.1} parent=5 // pred_check_branch
        %717 = sbr.rel (%p715) target = $region52
      $region51: #{tpu_custom_call.1} parent=5 // pred_region
        %s718 = ssub.s32 %s21, 2
        // Predicated region
        $region53: #{tpu_custom_call.1} parent=51 // pred_check
          %p719 = pneg %p134
        $region54: #{tpu_custom_call.1} parent=51 // pred_check_branch
          %721 = sbr.rel (%p719) target = $region56
        $region55: #{tpu_custom_call.1} parent=51 // pred_region
          %s722 = sand.u32 %s119, 1
          %s723 = scalar_lea.sflag [#allocation4], %s722
          %s724 = sand.u32 %s119, 1
          %s725 = smul.addr %s724, 2
          %s726 = scalar_lea.vmem [#allocation7], %s725
          %727 = dma.done %s723, 32
        $region56: #{tpu_custom_call.1} parent=51 // pred_fallthru
          _
        // Predicated region
        $region57: #{tpu_custom_call.1} parent=51 // pred_check
          %p728 = pneg %p162
        $region58: #{tpu_custom_call.1} parent=51 // pred_check_branch
          %730 = sbr.rel (%p728) target = $region60
        $region59: #{tpu_custom_call.1} parent=51 // pred_region
          %s731 = sand.u32 %s147, 1
          %s732 = scalar_lea.sflag [#allocation9], %s731
          %s733 = sand.u32 %s147, 1
          %s734 = smul.addr %s733, 2
          %s735 = scalar_lea.vmem [#allocation8], %s734
          %736 = dma.done %s732, 32
        $region60: #{tpu_custom_call.1} parent=51 // pred_fallthru
          _
      $region52: #{tpu_custom_call.1} parent=5 // pred_fallthru
        _
    $region6: #{tpu_custom_call.1} parent=1 // loop_footer
      %s25 = sadd.s32 1, %s21
    $region7: #{tpu_custom_call.1} parent=1 // loop_footer_branch
      %20 = sbr.rel target = $region3
    $region8: #{tpu_custom_call.1} parent=1 // loop_exit
      _
    %737 = vsyncpa [#allocation3], 1
    %s738 = scalar_lea.sflag [#allocation3], 1
    %739 = vsyncpa %s738, 1
    %740 = vsyncpa [#allocation6], 1
    %741 = vsyncpa [#allocation4], 1
    %s742 = scalar_lea.sflag [#allocation4], 1
    %743 = vsyncpa %s742, 1
    %744 = vsyncpa [#allocation9], 1
    %s745 = scalar_lea.sflag [#allocation9], 1
    %746 = vsyncpa %s745, 1

</llo_original>
